<compile_context>
chip_gen: v7x
topology: tpu7x:2x2x1
jax: 0.10.0
libtpu: 0.0.40
codegen_flags: <defaults>
</compile_context>

<pallas_src>
import functools

import jax
import jax.numpy as jnp
import numpy as np
from jax import lax
from jax.experimental import pallas as pl
from jax.experimental.pallas import tpu as pltpu


# 3x3 tap offsets in kernel-position (row-major) order: t = (dy+1)*3 + (dx+1).
_TAPS = tuple((dy, dx) for dy in (-1, 0, 1) for dx in (-1, 0, 1))


def _round_up(x, m):
    return (x + m - 1) // m * m


def _tap_masks(height, width):
    """(9, H*W) float32 0/1 masks: tap t valid at flattened output position p."""
    yy, xx = np.meshgrid(np.arange(height), np.arange(width), indexing="ij")
    yy = yy.reshape(-1)
    xx = xx.reshape(-1)
    rows = []
    for dy, dx in _TAPS:
        ok = ((yy + dy >= 0) & (yy + dy < height) &
              (xx + dx >= 0) & (xx + dx < width))
        rows.append(ok.astype(np.float32))
    return jnp.asarray(np.stack(rows, axis=0))


def _weights_to_im2col(w_oihw, c_pad):
    """(Cout, Cin, 3, 3) OIHW -> (Cout, 9*c_pad); K index = tap*c_pad + ci."""
    cout, cin = w_oihw.shape[0], w_oihw.shape[1]
    w = jnp.transpose(w_oihw, (0, 2, 3, 1))                   # (Cout, 3, 3, Cin)
    w = jnp.pad(w, ((0, 0), (0, 0), (0, 0), (0, c_pad - cin)))
    return w.reshape(cout, 9 * c_pad)


def _fused_double_conv_kernel(x_ref, masks_ref, w1_ref, b1_ref, w2_ref, b2_ref,
                              o_ref, pad1_ref, pad2_ref,
                              *, height, width, margin):
    """conv3x3+bias+ReLU twice on one lane-dense (C, H*W) image."""
    hw = height * width
    cin = x_ref.shape[0]
    cout = o_ref.shape[0]

    # Zero the halo scratches every step (cheap, and safe under megacore
    # partitioning of the "parallel" grid axis), then place the activation
    # into the lane-aligned interior.
    pad1_ref[...] = jnp.zeros_like(pad1_ref)
    pad2_ref[...] = jnp.zeros_like(pad2_ref)
    pad1_ref[0:cin, margin:margin + hw] = x_ref[...].astype(jnp.float32)

    def conv3x3_relu(pad_ref, w_ref, b_ref):
        # im2col: the 9 taps are contiguous lane-offset loads from the
        # zero-margined flat scratch; the 0/1 mask removes taps that would
        # otherwise read across a row boundary.  One deep MXU matmul.
        pieces = []
        for t, (dy, dx) in enumerate(_TAPS):
            d = dy * width + dx
            piece = pad_ref[:, margin + d:margin + d + hw]     # (Cp, HW)
            pieces.append(piece * masks_ref[t:t + 1, :])
        patches = jnp.concatenate(pieces, axis=0)              # (9*Cp, HW)
        acc = jnp.dot(w_ref[...], patches,
                      preferred_element_type=jnp.float32)      # (Cout, HW)
        return jnp.maximum(acc + b_ref[...], 0.0)              # bias + ReLU

    h1 = conv3x3_relu(pad1_ref, w1_ref, b1_ref)                # conv1 + ReLU
    pad2_ref[0:cout, margin:margin + hw] = h1                  # stays in VMEM
    out = conv3x3_relu(pad2_ref, w2_ref, b2_ref)               # conv2 + ReLU
    o_ref[...] = out.astype(o_ref.dtype)


def fused_double_conv(x_nchw, w1_oihw, b1, w2_oihw, b2):
    """conv3x3+ReLU -> conv3x3+ReLU, NCHW in / NCHW out, one pallas_call."""
    B, Cin, H, W = x_nchw.shape
    Cout = w1_oihw.shape[0]
    HW = H * W
    CinP = _round_up(Cin, 8)          # pad contraction channels to sublane tile
    CoutP = _round_up(Cout, 8)
    margin = _round_up(W + 1, 128)    # lane-aligned interior offset in scratch

    x_flat = x_nchw.reshape(B, Cin, HW)             # free reshape, stays NCHW
    masks = _tap_masks(H, W)                        # (9, HW) f32 constants
    w1m = _weights_to_im2col(w1_oihw, CinP)         # (Cout, 9*CinP)
    w2m = _weights_to_im2col(w2_oihw, CoutP)        # (Cout, 9*CoutP)
    b1c = b1.reshape(Cout, 1)
    b2c = b2.reshape(Cout, 1)

    kernel = functools.partial(_fused_double_conv_kernel,
                               height=H, width=W, margin=margin)
    out_flat = pl.pallas_call(
        kernel,
        out_shape=jax.ShapeDtypeStruct((B, Cout, HW), x_nchw.dtype),
        grid=(B,),
        in_specs=[
            pl.BlockSpec((None, Cin, HW), lambda i: (i, 0, 0)),   # activation
            pl.BlockSpec((9, HW), lambda i: (0, 0)),              # tap masks
            pl.BlockSpec((Cout, 9 * CinP), lambda i: (0, 0)),     # conv1 W
            pl.BlockSpec((Cout, 1), lambda i: (0, 0)),            # conv1 b
            pl.BlockSpec((Cout, 9 * CoutP), lambda i: (0, 0)),    # conv2 W
            pl.BlockSpec((Cout, 1), lambda i: (0, 0)),            # conv2 b
        ],
        out_specs=pl.BlockSpec((None, Cout, HW), lambda i: (i, 0, 0)),
        scratch_shapes=[
            pltpu.VMEM((CinP, HW + 2 * margin), jnp.float32),     # conv1 halo
            pltpu.VMEM((CoutP, HW + 2 * margin), jnp.float32),    # conv2 halo
        ],
        compiler_params=pltpu.CompilerParams(
            dimension_semantics=("parallel",)),
    )(x_flat, masks, w1m, b1c, w2m, b2c)
    return out_flat.reshape(B, Cout, H, W)


@jax.jit
def conv_module_forward(x_nchw, params):
    """Mirrors Conv.forward: conv1 -> ReLU -> conv2 -> ReLU (NCHW in/out)."""
    w1, b1, w2, b2 = params
    return fused_double_conv(x_nchw, w1, b1, w2, b2)


def init_params(key, in_channels, out_channels):
    """Same parameter shapes as nn.Conv2d (OIHW, 3x3), PyTorch-style init."""
    k1, k2, k3, k4 = jax.random.split(key, 4)
    bound1 = 1.0 / float(np.sqrt(in_channels * 9.0))
    bound2 = 1.0 / float(np.sqrt(out_channels * 9.0))
    w1 = jax.random.uniform(k1, (out_channels, in_channels, 3, 3),
                            jnp.float32, -bound1, bound1)
    b1 = jax.random.uniform(k2, (out_channels,), jnp.float32, -bound1, bound1)
    w2 = jax.random.uniform(k3, (out_channels, out_channels, 3, 3),
                            jnp.float32, -bound2, bound2)
    b2 = jax.random.uniform(k4, (out_channels,), jnp.float32, -bound2, bound2)
    return w1, b1, w2, b2


def _reference(x_nchw, params):
    """Pure-JAX reference of the PyTorch forward (for correctness check)."""
    w1, b1, w2, b2 = params
    dn = ("NCHW", "OIHW", "NCHW")
    y = lax.conv_general_dilated(x_nchw, w1, (1, 1), "SAME",
                                 dimension_numbers=dn,
                                 precision=lax.Precision.HIGHEST)
    y = jnp.maximum(y + b1[None, :, None, None], 0.0)
    y = lax.conv_general_dilated(y, w2, (1, 1), "SAME",
                                 dimension_numbers=dn,
                                 precision=lax.Precision.HIGHEST)
    y = jnp.maximum(y + b2[None, :, None, None], 0.0)
    return y


if __name__ == "__main__":
    key = jax.random.PRNGKey(0)
    kx, kp = jax.random.split(key)

    B, Cin, Cout, H, W = 2, 4, 8, 16, 16
    x = jax.random.normal(kx, (B, Cin, H, W), jnp.float32)   # NCHW like PyTorch
    params = init_params(kp, Cin, Cout)

    y = conv_module_forward(x, params)
    y = jax.block_until_ready(y)

    y_ref = _reference(x, params)
    assert y.shape == (B, Cout, H, W), y.shape
    err = float(jnp.max(jnp.abs(y - y_ref)))
    assert jnp.allclose(y, y_ref, atol=1e-4, rtol=1e-4), err
    print("KERNEL_OK")
</pallas_src>

<mosaic_0001>
module attributes {stable_mosaic.version = 11 : i64} {
  func.func @_fused_double_conv_kernel(%arg0: i32, %arg1: memref<1x4x256xf32, #tpu.memory_space<vmem>>, %arg2: memref<9x256xf32, #tpu.memory_space<vmem>>, %arg3: memref<8x72xf32, #tpu.memory_space<vmem>>, %arg4: memref<8x1xf32, #tpu.memory_space<vmem>>, %arg5: memref<8x72xf32, #tpu.memory_space<vmem>>, %arg6: memref<8x1xf32, #tpu.memory_space<vmem>>, %arg7: memref<1x8x256xf32, #tpu.memory_space<vmem>>, %arg8: memref<8x512xf32, #tpu.memory_space<vmem>>, %arg9: memref<8x512xf32, #tpu.memory_space<vmem>>) attributes {dimension_semantics = [#tpu.dimension_semantics<parallel>], iteration_bounds = array<i64: 2>, scalar_prefetch = 0 : i64, scratch_operands = 2 : i64, tpu.core_type = #tpu.core_type<tc>, window_params = [{transform_indices = @transform_0, window_bounds = array<i64: 1, 4, 256>}, {pipeline_mode = #tpu.pipeline_mode<synchronous>, transform_indices = @transform_1, window_bounds = array<i64: 9, 256>}, {pipeline_mode = #tpu.pipeline_mode<synchronous>, transform_indices = @transform_2, window_bounds = array<i64: 8, 72>}, {pipeline_mode = #tpu.pipeline_mode<synchronous>, transform_indices = @transform_3, window_bounds = array<i64: 8, 1>}, {pipeline_mode = #tpu.pipeline_mode<synchronous>, transform_indices = @transform_4, window_bounds = array<i64: 8, 72>}, {pipeline_mode = #tpu.pipeline_mode<synchronous>, transform_indices = @transform_5, window_bounds = array<i64: 8, 1>}, {transform_indices = @transform_6, window_bounds = array<i64: 1, 8, 256>}]} {
    %cst = arith.constant 0.000000e+00 : f32
    %0 = vector.broadcast %cst : f32 to vector<8x512xf32>
    %c0 = arith.constant 0 : index
    %c0_0 = arith.constant 0 : index
    %1 = vector.load %arg8[%c0, %c0_0] : memref<8x512xf32, #tpu.memory_space<vmem>>, vector<8x512xf32>
    tpu.vector_store %arg8[%c0, %c0_0], %0 {strides = array<i32>} : memref<8x512xf32, #tpu.memory_space<vmem>>, vector<8x512xf32>,
    %cst_1 = arith.constant 0.000000e+00 : f32
    %2 = vector.broadcast %cst_1 : f32 to vector<8x512xf32>
    %c0_2 = arith.constant 0 : index
    %c0_3 = arith.constant 0 : index
    %3 = vector.load %arg9[%c0_2, %c0_3] : memref<8x512xf32, #tpu.memory_space<vmem>>, vector<8x512xf32>
    tpu.vector_store %arg9[%c0_2, %c0_3], %2 {strides = array<i32>} : memref<8x512xf32, #tpu.memory_space<vmem>>, vector<8x512xf32>,
    %c0_4 = arith.constant 0 : index
    %c0_5 = arith.constant 0 : index
    %c0_6 = arith.constant 0 : index
    %4 = vector.load %arg1[%c0_4, %c0_5, %c0_6] : memref<1x4x256xf32, #tpu.memory_space<vmem>>, vector<1x4x256xf32>
    %5 = vector.shape_cast %4 : vector<1x4x256xf32> to vector<4x256xf32>
    %c0_7 = arith.constant 0 : index
    %c128 = arith.constant 128 : index
    %6 = vector.load %arg8[%c0_7, %c128] : memref<8x512xf32, #tpu.memory_space<vmem>>, vector<4x256xf32>
    tpu.vector_store %arg8[%c0_7, %c128], %5 {strides = array<i32>} : memref<8x512xf32, #tpu.memory_space<vmem>>, vector<4x256xf32>,
    %c0_8 = arith.constant 0 : index
    %c111 = arith.constant 111 : index
    %7 = vector.load %arg8[%c0_8, %c111] : memref<8x512xf32, #tpu.memory_space<vmem>>, vector<8x256xf32>
    %c0_9 = arith.constant 0 : index
    %c0_10 = arith.constant 0 : index
    %8 = vector.load %arg2[%c0_9, %c0_10] : memref<9x256xf32, #tpu.memory_space<vmem>>, vector<1x256xf32>
    %9 = vector.broadcast %8 : vector<1x256xf32> to vector<8x256xf32>
    %10 = arith.mulf %7, %9 : vector<8x256xf32>
    %c0_11 = arith.constant 0 : index
    %c112 = arith.constant 112 : index
    %11 = vector.load %arg8[%c0_11, %c112] : memref<8x512xf32, #tpu.memory_space<vmem>>, vector<8x256xf32>
    %c1 = arith.constant 1 : index
    %c0_12 = arith.constant 0 : index
    %12 = vector.load %arg2[%c1, %c0_12] : memref<9x256xf32, #tpu.memory_space<vmem>>, vector<1x256xf32>
    %13 = vector.broadcast %12 : vector<1x256xf32> to vector<8x256xf32>
    %14 = arith.mulf %11, %13 : vector<8x256xf32>
    %c0_13 = arith.constant 0 : index
    %c113 = arith.constant 113 : index
    %15 = vector.load %arg8[%c0_13, %c113] : memref<8x512xf32, #tpu.memory_space<vmem>>, vector<8x256xf32>
    %c2 = arith.constant 2 : index
    %c0_14 = arith.constant 0 : index
    %16 = vector.load %arg2[%c2, %c0_14] : memref<9x256xf32, #tpu.memory_space<vmem>>, vector<1x256xf32>
    %17 = vector.broadcast %16 : vector<1x256xf32> to vector<8x256xf32>
    %18 = arith.mulf %15, %17 : vector<8x256xf32>
    %c0_15 = arith.constant 0 : index
    %c127 = arith.constant 127 : index
    %19 = vector.load %arg8[%c0_15, %c127] : memref<8x512xf32, #tpu.memory_space<vmem>>, vector<8x256xf32>
    %c3 = arith.constant 3 : index
    %c0_16 = arith.constant 0 : index
    %20 = vector.load %arg2[%c3, %c0_16] : memref<9x256xf32, #tpu.memory_space<vmem>>, vector<1x256xf32>
    %21 = vector.broadcast %20 : vector<1x256xf32> to vector<8x256xf32>
    %22 = arith.mulf %19, %21 : vector<8x256xf32>
    %c0_17 = arith.constant 0 : index
    %c128_18 = arith.constant 128 : index
    %23 = vector.load %arg8[%c0_17, %c128_18] : memref<8x512xf32, #tpu.memory_space<vmem>>, vector<8x256xf32>
    %c4 = arith.constant 4 : index
    %c0_19 = arith.constant 0 : index
    %24 = vector.load %arg2[%c4, %c0_19] : memref<9x256xf32, #tpu.memory_space<vmem>>, vector<1x256xf32>
    %25 = vector.broadcast %24 : vector<1x256xf32> to vector<8x256xf32>
    %26 = arith.mulf %23, %25 : vector<8x256xf32>
    %c0_20 = arith.constant 0 : index
    %c129 = arith.constant 129 : index
    %27 = vector.load %arg8[%c0_20, %c129] : memref<8x512xf32, #tpu.memory_space<vmem>>, vector<8x256xf32>
    %c5 = arith.constant 5 : index
    %c0_21 = arith.constant 0 : index
    %28 = vector.load %arg2[%c5, %c0_21] : memref<9x256xf32, #tpu.memory_space<vmem>>, vector<1x256xf32>
    %29 = vector.broadcast %28 : vector<1x256xf32> to vector<8x256xf32>
    %30 = arith.mulf %27, %29 : vector<8x256xf32>
    %c0_22 = arith.constant 0 : index
    %c143 = arith.constant 143 : index
    %31 = vector.load %arg8[%c0_22, %c143] : memref<8x512xf32, #tpu.memory_space<vmem>>, vector<8x256xf32>
    %c6 = arith.constant 6 : index
    %c0_23 = arith.constant 0 : index
    %32 = vector.load %arg2[%c6, %c0_23] : memref<9x256xf32, #tpu.memory_space<vmem>>, vector<1x256xf32>
    %33 = vector.broadcast %32 : vector<1x256xf32> to vector<8x256xf32>
    %34 = arith.mulf %31, %33 : vector<8x256xf32>
    %c0_24 = arith.constant 0 : index
    %c144 = arith.constant 144 : index
    %35 = vector.load %arg8[%c0_24, %c144] : memref<8x512xf32, #tpu.memory_space<vmem>>, vector<8x256xf32>
    %c7 = arith.constant 7 : index
    %c0_25 = arith.constant 0 : index
    %36 = vector.load %arg2[%c7, %c0_25] : memref<9x256xf32, #tpu.memory_space<vmem>>, vector<1x256xf32>
    %37 = vector.broadcast %36 : vector<1x256xf32> to vector<8x256xf32>
    %38 = arith.mulf %35, %37 : vector<8x256xf32>
    %c0_26 = arith.constant 0 : index
    %c145 = arith.constant 145 : index
    %39 = vector.load %arg8[%c0_26, %c145] : memref<8x512xf32, #tpu.memory_space<vmem>>, vector<8x256xf32>
    %c8 = arith.constant 8 : index
    %c0_27 = arith.constant 0 : index
    %40 = vector.load %arg2[%c8, %c0_27] : memref<9x256xf32, #tpu.memory_space<vmem>>, vector<1x256xf32>
    %41 = vector.broadcast %40 : vector<1x256xf32> to vector<8x256xf32>
    %42 = arith.mulf %39, %41 : vector<8x256xf32>
    %43 = tpu.concatenate %10, %14, %18, %22, %26, %30, %34, %38, %42 in 0 : vector<8x256xf32>, vector<8x256xf32>, vector<8x256xf32>, vector<8x256xf32>, vector<8x256xf32>, vector<8x256xf32>, vector<8x256xf32>, vector<8x256xf32>, vector<8x256xf32> -> vector<72x256xf32>
    %c0_28 = arith.constant 0 : index
    %c0_29 = arith.constant 0 : index
    %44 = vector.load %arg3[%c0_28, %c0_29] : memref<8x72xf32, #tpu.memory_space<vmem>>, vector<8x72xf32>
    %cst_30 = arith.constant dense<0.000000e+00> : vector<8x256xf32>
    %45 = tpu.matmul %44, %43, %cst_30 {dimension_numbers = #tpu.dot_dimension_numbers<[1], [0], [0], [1], [0, 0, 1, 1], [], []>} : vector<8x72xf32>, vector<72x256xf32>, vector<8x256xf32> -> vector<8x256xf32>
    %c0_31 = arith.constant 0 : index
    %c0_32 = arith.constant 0 : index
    %46 = vector.load %arg4[%c0_31, %c0_32] : memref<8x1xf32, #tpu.memory_space<vmem>>, vector<8x1xf32>
    %47 = vector.broadcast %46 : vector<8x1xf32> to vector<8x256xf32>
    %48 = arith.addf %45, %47 : vector<8x256xf32>
    %cst_33 = arith.constant 0.000000e+00 : f32
    %49 = vector.broadcast %cst_33 : f32 to vector<8x256xf32>
    %50 = arith.maximumf %48, %49 : vector<8x256xf32>
    %c0_34 = arith.constant 0 : index
    %c128_35 = arith.constant 128 : index
    %51 = vector.load %arg9[%c0_34, %c128_35] : memref<8x512xf32, #tpu.memory_space<vmem>>, vector<8x256xf32>
    tpu.vector_store %arg9[%c0_34, %c128_35], %50 {strides = array<i32>} : memref<8x512xf32, #tpu.memory_space<vmem>>, vector<8x256xf32>,
    %c0_36 = arith.constant 0 : index
    %c111_37 = arith.constant 111 : index
    %52 = vector.load %arg9[%c0_36, %c111_37] : memref<8x512xf32, #tpu.memory_space<vmem>>, vector<8x256xf32>
    %c0_38 = arith.constant 0 : index
    %c0_39 = arith.constant 0 : index
    %53 = vector.load %arg2[%c0_38, %c0_39] : memref<9x256xf32, #tpu.memory_space<vmem>>, vector<1x256xf32>
    %54 = vector.broadcast %53 : vector<1x256xf32> to vector<8x256xf32>
    %55 = arith.mulf %52, %54 : vector<8x256xf32>
    %c0_40 = arith.constant 0 : index
    %c112_41 = arith.constant 112 : index
    %56 = vector.load %arg9[%c0_40, %c112_41] : memref<8x512xf32, #tpu.memory_space<vmem>>, vector<8x256xf32>
    %c1_42 = arith.constant 1 : index
    %c0_43 = arith.constant 0 : index
    %57 = vector.load %arg2[%c1_42, %c0_43] : memref<9x256xf32, #tpu.memory_space<vmem>>, vector<1x256xf32>
    %58 = vector.broadcast %57 : vector<1x256xf32> to vector<8x256xf32>
    %59 = arith.mulf %56, %58 : vector<8x256xf32>
    %c0_44 = arith.constant 0 : index
    %c113_45 = arith.constant 113 : index
    %60 = vector.load %arg9[%c0_44, %c113_45] : memref<8x512xf32, #tpu.memory_space<vmem>>, vector<8x256xf32>
    %c2_46 = arith.constant 2 : index
    %c0_47 = arith.constant 0 : index
    %61 = vector.load %arg2[%c2_46, %c0_47] : memref<9x256xf32, #tpu.memory_space<vmem>>, vector<1x256xf32>
    %62 = vector.broadcast %61 : vector<1x256xf32> to vector<8x256xf32>
    %63 = arith.mulf %60, %62 : vector<8x256xf32>
    %c0_48 = arith.constant 0 : index
    %c127_49 = arith.constant 127 : index
    %64 = vector.load %arg9[%c0_48, %c127_49] : memref<8x512xf32, #tpu.memory_space<vmem>>, vector<8x256xf32>
    %c3_50 = arith.constant 3 : index
    %c0_51 = arith.constant 0 : index
    %65 = vector.load %arg2[%c3_50, %c0_51] : memref<9x256xf32, #tpu.memory_space<vmem>>, vector<1x256xf32>
    %66 = vector.broadcast %65 : vector<1x256xf32> to vector<8x256xf32>
    %67 = arith.mulf %64, %66 : vector<8x256xf32>
    %c0_52 = arith.constant 0 : index
    %c128_53 = arith.constant 128 : index
    %68 = vector.load %arg9[%c0_52, %c128_53] : memref<8x512xf32, #tpu.memory_space<vmem>>, vector<8x256xf32>
    %c4_54 = arith.constant 4 : index
    %c0_55 = arith.constant 0 : index
    %69 = vector.load %arg2[%c4_54, %c0_55] : memref<9x256xf32, #tpu.memory_space<vmem>>, vector<1x256xf32>
    %70 = vector.broadcast %69 : vector<1x256xf32> to vector<8x256xf32>
    %71 = arith.mulf %68, %70 : vector<8x256xf32>
    %c0_56 = arith.constant 0 : index
    %c129_57 = arith.constant 129 : index
    %72 = vector.load %arg9[%c0_56, %c129_57] : memref<8x512xf32, #tpu.memory_space<vmem>>, vector<8x256xf32>
    %c5_58 = arith.constant 5 : index
    %c0_59 = arith.constant 0 : index
    %73 = vector.load %arg2[%c5_58, %c0_59] : memref<9x256xf32, #tpu.memory_space<vmem>>, vector<1x256xf32>
    %74 = vector.broadcast %73 : vector<1x256xf32> to vector<8x256xf32>
    %75 = arith.mulf %72, %74 : vector<8x256xf32>
    %c0_60 = arith.constant 0 : index
    %c143_61 = arith.constant 143 : index
    %76 = vector.load %arg9[%c0_60, %c143_61] : memref<8x512xf32, #tpu.memory_space<vmem>>, vector<8x256xf32>
    %c6_62 = arith.constant 6 : index
    %c0_63 = arith.constant 0 : index
    %77 = vector.load %arg2[%c6_62, %c0_63] : memref<9x256xf32, #tpu.memory_space<vmem>>, vector<1x256xf32>
    %78 = vector.broadcast %77 : vector<1x256xf32> to vector<8x256xf32>
    %79 = arith.mulf %76, %78 : vector<8x256xf32>
    %c0_64 = arith.constant 0 : index
    %c144_65 = arith.constant 144 : index
    %80 = vector.load %arg9[%c0_64, %c144_65] : memref<8x512xf32, #tpu.memory_space<vmem>>, vector<8x256xf32>
    %c7_66 = arith.constant 7 : index
    %c0_67 = arith.constant 0 : index
    %81 = vector.load %arg2[%c7_66, %c0_67] : memref<9x256xf32, #tpu.memory_space<vmem>>, vector<1x256xf32>
    %82 = vector.broadcast %81 : vector<1x256xf32> to vector<8x256xf32>
    %83 = arith.mulf %80, %82 : vector<8x256xf32>
    %c0_68 = arith.constant 0 : index
    %c145_69 = arith.constant 145 : index
    %84 = vector.load %arg9[%c0_68, %c145_69] : memref<8x512xf32, #tpu.memory_space<vmem>>, vector<8x256xf32>
    %c8_70 = arith.constant 8 : index
    %c0_71 = arith.constant 0 : index
    %85 = vector.load %arg2[%c8_70, %c0_71] : memref<9x256xf32, #tpu.memory_space<vmem>>, vector<1x256xf32>
    %86 = vector.broadcast %85 : vector<1x256xf32> to vector<8x256xf32>
    %87 = arith.mulf %84, %86 : vector<8x256xf32>
    %88 = tpu.concatenate %55, %59, %63, %67, %71, %75, %79, %83, %87 in 0 : vector<8x256xf32>, vector<8x256xf32>, vector<8x256xf32>, vector<8x256xf32>, vector<8x256xf32>, vector<8x256xf32>, vector<8x256xf32>, vector<8x256xf32>, vector<8x256xf32> -> vector<72x256xf32>
    %c0_72 = arith.constant 0 : index
    %c0_73 = arith.constant 0 : index
    %89 = vector.load %arg5[%c0_72, %c0_73] : memref<8x72xf32, #tpu.memory_space<vmem>>, vector<8x72xf32>
    %cst_74 = arith.constant dense<0.000000e+00> : vector<8x256xf32>
    %90 = tpu.matmul %89, %88, %cst_74 {dimension_numbers = #tpu.dot_dimension_numbers<[1], [0], [0], [1], [0, 0, 1, 1], [], []>} : vector<8x72xf32>, vector<72x256xf32>, vector<8x256xf32> -> vector<8x256xf32>
    %c0_75 = arith.constant 0 : index
    %c0_76 = arith.constant 0 : index
    %91 = vector.load %arg6[%c0_75, %c0_76] : memref<8x1xf32, #tpu.memory_space<vmem>>, vector<8x1xf32>
    %92 = vector.broadcast %91 : vector<8x1xf32> to vector<8x256xf32>
    %93 = arith.addf %90, %92 : vector<8x256xf32>
    %cst_77 = arith.constant 0.000000e+00 : f32
    %94 = vector.broadcast %cst_77 : f32 to vector<8x256xf32>
    %95 = arith.maximumf %93, %94 : vector<8x256xf32>
    %c0_78 = arith.constant 0 : index
    %c0_79 = arith.constant 0 : index
    %c0_80 = arith.constant 0 : index
    %96 = vector.load %arg7[%c0_78, %c0_79, %c0_80] : memref<1x8x256xf32, #tpu.memory_space<vmem>>, vector<1x8x256xf32>
    %97 = vector.shape_cast %96 : vector<1x8x256xf32> to vector<8x256xf32>
    %98 = vector.shape_cast %95 : vector<8x256xf32> to vector<1x8x256xf32>
    tpu.vector_store %arg7[%c0_78, %c0_79, %c0_80], %98 {strides = array<i32>} : memref<1x8x256xf32, #tpu.memory_space<vmem>>, vector<1x8x256xf32>,
    return
  }
  func.func @transform_0(%arg0: i32) -> (i32, i32, i32) {
    %c0_i32 = arith.constant 0 : i32
    %c0_i32_0 = arith.constant 0 : i32
    %c0_i32_1 = arith.constant 0 : i32
    return %arg0, %c0_i32, %c0_i32_0 : i32, i32, i32
  }
  func.func @transform_1(%arg0: i32) -> (i32, i32) {
    %c0_i32 = arith.constant 0 : i32
    %c0_i32_0 = arith.constant 0 : i32
    %c0_i32_1 = arith.constant 0 : i32
    return %c0_i32, %c0_i32_0 : i32, i32
  }
  func.func @transform_2(%arg0: i32) -> (i32, i32) {
    %c0_i32 = arith.constant 0 : i32
    %c0_i32_0 = arith.constant 0 : i32
    %c0_i32_1 = arith.constant 0 : i32
    return %c0_i32, %c0_i32_0 : i32, i32
  }
  func.func @transform_3(%arg0: i32) -> (i32, i32) {
    %c0_i32 = arith.constant 0 : i32
    %c0_i32_0 = arith.constant 0 : i32
    %c0_i32_1 = arith.constant 0 : i32
    return %c0_i32, %c0_i32_0 : i32, i32
  }
  func.func @transform_4(%arg0: i32) -> (i32, i32) {
    %c0_i32 = arith.constant 0 : i32
    %c0_i32_0 = arith.constant 0 : i32
    %c0_i32_1 = arith.constant 0 : i32
    return %c0_i32, %c0_i32_0 : i32, i32
  }
  func.func @transform_5(%arg0: i32) -> (i32, i32) {
    %c0_i32 = arith.constant 0 : i32
    %c0_i32_0 = arith.constant 0 : i32
    %c0_i32_1 = arith.constant 0 : i32
    return %c0_i32, %c0_i32_0 : i32, i32
  }
  func.func @transform_6(%arg0: i32) -> (i32, i32, i32) {
    %c0_i32 = arith.constant 0 : i32
    %c0_i32_0 = arith.constant 0 : i32
    %c0_i32_1 = arith.constant 0 : i32
    return %arg0, %c0_i32, %c0_i32_0 : i32, i32, i32
  }
}

</mosaic_0001>

<llo_original>
// kernel: conv_module_forward.1
$region0: #{conv_module_forward.1}
  #allocation0 [shape = 'u32[]', space=smem, size = 0x4, offset = 0x4, fixed_abs, tag = 'smem constant byte address 0x4 - core index']
  #allocation1 [shape = 'u32[144,128]{1,0:T(1,128)}', space=vmem, size = 0x12000, scoped, tag = 'internal scratch']
  #allocation2 [shape = 'f32[8,512]{1,0:T(8,128)}', space=vmem, size = 0x4000, scoped, tag = 'scratch operand']
  #allocation3 [shape = 'f32[8,512]{1,0:T(8,128)}', space=vmem, size = 0x4000, scoped, tag = 'scratch operand']
  %s0 = inlined_call_operand.vmem [shape: f32[2,4,256], index: 0, kind: input, shape index: {}]
  %s1 = inlined_call_operand.vmem [shape: f32[9,256], index: 1, kind: input, shape index: {}]
  %s2 = inlined_call_operand.vmem [shape: f32[8,72], index: 2, kind: input, shape index: {}]
  %s3 = inlined_call_operand.vmem [shape: f32[8,1], index: 3, kind: input, shape index: {}]
  %s4 = inlined_call_operand.vmem [shape: f32[8,72], index: 4, kind: input, shape index: {}]
  %s5 = inlined_call_operand.vmem [shape: f32[8,1], index: 5, kind: input, shape index: {}]
  %s6 = inlined_call_operand.vmem [shape: f32[2,8,256], index: 6, kind: output, shape index: {}]
  %s7 = sld [smem:[#allocation0]]
  $region57: #{conv_module_forward.1} parent=0
    _
  %s9 = ssub.s32 1, %s7
  %s10 = scalar_select 0, %s9, %s7
  loop: start=0, step=1, limit=4
  $region2: #{conv_module_forward.1} parent=0 // loop_pre_header
    _
  $region3: #{conv_module_forward.1} parent=0 // loop_header
    %s12 = sphi 0, %s16
    %p13 = scmp.ge.s32.totalorder %s12, 4
    %s22 = sphi 0, %s24
    %s25 = sphi 0, %s22
    %s26 = sphi 0, %s25
    %s42 = sphi 0, %s26
    %s46 = sphi 0, %s46
    %s48 = sphi 0, %s46
    %s49 = sphi 0, %s48
    %s63 = sphi 0, %s49
    %s67 = sphi 0, %s67
    %s69 = sphi 0, %s67
    %s70 = sphi 0, %s69
    %s84 = sphi 0, %s70
    %s88 = sphi 0, %s88
    %s90 = sphi 0, %s88
    %s91 = sphi 0, %s90
    %s105 = sphi 0, %s91
    %s109 = sphi 0, %s109
    %s111 = sphi 0, %s109
    %s112 = sphi 0, %s111
    %s126 = sphi 0, %s112
    %s130 = sphi 0, %s130
    %s132 = sphi 0, %s130
    %s133 = sphi 0, %s132
    %s147 = sphi 0, %s133
    %s153 = sphi 0, %s155
    %s156 = sphi 0, %s153
    %s157 = sphi 0, %s156
    %s173 = sphi 0, %s157
  $region4: #{conv_module_forward.1} parent=0 // loop_header_branch
    %15 = sbr.rel (%p13) target = $region8
  $region5: #{conv_module_forward.1} parent=0 // loop_body
    %s17 = ssub.s32 %s12, 1
    %s18 = ssub.s32 %s12, 2
    %s19 = sadd.s32 %s12, 1
    %s20 = ssub.s32 %s12, %s19
    %p21 = scmp.eq.s32.totalorder %s20, 0
    %s23 = sadd.s32 %s22, 1
    %s24 = scalar_select %p21, %s22, %s23
    %p27 = pneg %p21
    %p28 = scmp.eq.s32.totalorder %s12, 1
    %p29 = por %p27, %p28
    %p30 = scmp.ne.s32.totalorder %s22, %s25
    %p31 = scmp.eq.s32.totalorder %s12, 0
    %p32 = por %p30, %p31
    %p33 = scmp.ne.s32.totalorder %s22, %s25
    %p34 = scmp.eq.s32.totalorder %s17, 1
    %p35 = por %p33, %p34
    %p36 = scmp.ne.s32.totalorder %s25, %s26
    %p37 = scmp.eq.s32.totalorder %s17, 0
    %p38 = por %p36, %p37
    %p39 = scmp.ne.s32.totalorder %s25, %s26
    %p40 = scmp.eq.s32.totalorder %s18, 1
    %p41 = por %p39, %p40
    %p43 = scmp.ne.s32.totalorder %s26, %s42
    %p44 = scmp.eq.s32.totalorder %s18, 0
    %p45 = por %p43, %p44
    %s47 = sadd.s32 %s46, 1
    %p50 = scmp.eq.s32.totalorder %s12, 1
    %p51 = scmp.ne.s32.totalorder %s46, %s48
    %p52 = scmp.eq.s32.totalorder %s12, 0
    %p53 = por %p51, %p52
    %p54 = scmp.ne.s32.totalorder %s46, %s48
    %p55 = scmp.eq.s32.totalorder %s17, 1
    %p56 = por %p54, %p55
    %p57 = scmp.ne.s32.totalorder %s48, %s49
    %p58 = scmp.eq.s32.totalorder %s17, 0
    %p59 = por %p57, %p58
    %p60 = scmp.ne.s32.totalorder %s48, %s49
    %p61 = scmp.eq.s32.totalorder %s18, 1
    %p62 = por %p60, %p61
    %p64 = scmp.ne.s32.totalorder %s49, %s63
    %p65 = scmp.eq.s32.totalorder %s18, 0
    %p66 = por %p64, %p65
    %s68 = sadd.s32 %s67, 1
    %p71 = scmp.eq.s32.totalorder %s12, 1
    %p72 = scmp.ne.s32.totalorder %s67, %s69
    %p73 = scmp.eq.s32.totalorder %s12, 0
    %p74 = por %p72, %p73
    %p75 = scmp.ne.s32.totalorder %s67, %s69
    %p76 = scmp.eq.s32.totalorder %s17, 1
    %p77 = por %p75, %p76
    %p78 = scmp.ne.s32.totalorder %s69, %s70
    %p79 = scmp.eq.s32.totalorder %s17, 0
    %p80 = por %p78, %p79
    %p81 = scmp.ne.s32.totalorder %s69, %s70
    %p82 = scmp.eq.s32.totalorder %s18, 1
    %p83 = por %p81, %p82
    %p85 = scmp.ne.s32.totalorder %s70, %s84
    %p86 = scmp.eq.s32.totalorder %s18, 0
    %p87 = por %p85, %p86
    %s89 = sadd.s32 %s88, 1
    %p92 = scmp.eq.s32.totalorder %s12, 1
    %p93 = scmp.ne.s32.totalorder %s88, %s90
    %p94 = scmp.eq.s32.totalorder %s12, 0
    %p95 = por %p93, %p94
    %p96 = scmp.ne.s32.totalorder %s88, %s90
    %p97 = scmp.eq.s32.totalorder %s17, 1
    %p98 = por %p96, %p97
    %p99 = scmp.ne.s32.totalorder %s90, %s91
    %p100 = scmp.eq.s32.totalorder %s17, 0
    %p101 = por %p99, %p100
    %p102 = scmp.ne.s32.totalorder %s90, %s91
    %p103 = scmp.eq.s32.totalorder %s18, 1
    %p104 = por %p102, %p103
    %p106 = scmp.ne.s32.totalorder %s91, %s105
    %p107 = scmp.eq.s32.totalorder %s18, 0
    %p108 = por %p106, %p107
    %s110 = sadd.s32 %s109, 1
    %p113 = scmp.eq.s32.totalorder %s12, 1
    %p114 = scmp.ne.s32.totalorder %s109, %s111
    %p115 = scmp.eq.s32.totalorder %s12, 0
    %p116 = por %p114, %p115
    %p117 = scmp.ne.s32.totalorder %s109, %s111
    %p118 = scmp.eq.s32.totalorder %s17, 1
    %p119 = por %p117, %p118
    %p120 = scmp.ne.s32.totalorder %s111, %s112
    %p121 = scmp.eq.s32.totalorder %s17, 0
    %p122 = por %p120, %p121
    %p123 = scmp.ne.s32.totalorder %s111, %s112
    %p124 = scmp.eq.s32.totalorder %s18, 1
    %p125 = por %p123, %p124
    %p127 = scmp.ne.s32.totalorder %s112, %s126
    %p128 = scmp.eq.s32.totalorder %s18, 0
    %p129 = por %p127, %p128
    %s131 = sadd.s32 %s130, 1
    %p134 = scmp.eq.s32.totalorder %s12, 1
    %p135 = scmp.ne.s32.totalorder %s130, %s132
    %p136 = scmp.eq.s32.totalorder %s12, 0
    %p137 = por %p135, %p136
    %p138 = scmp.ne.s32.totalorder %s130, %s132
    %p139 = scmp.eq.s32.totalorder %s17, 1
    %p140 = por %p138, %p139
    %p141 = scmp.ne.s32.totalorder %s132, %s133
    %p142 = scmp.eq.s32.totalorder %s17, 0
    %p143 = por %p141, %p142
    %p144 = scmp.ne.s32.totalorder %s132, %s133
    %p145 = scmp.eq.s32.totalorder %s18, 1
    %p146 = por %p144, %p145
    %p148 = scmp.ne.s32.totalorder %s133, %s147
    %p149 = scmp.eq.s32.totalorder %s18, 0
    %p150 = por %p148, %p149
    %s151 = ssub.s32 %s12, %s19
    %p152 = scmp.eq.s32.totalorder %s151, 0
    %s154 = sadd.s32 %s153, 1
    %s155 = scalar_select %p152, %s153, %s154
    %p158 = pneg %p152
    %p159 = scmp.eq.s32.totalorder %s12, 1
    %p160 = por %p158, %p159
    %p161 = scmp.ne.s32.totalorder %s153, %s156
    %p162 = scmp.eq.s32.totalorder %s12, 0
    %p163 = por %p161, %p162
    %p164 = scmp.ne.s32.totalorder %s153, %s156
    %p165 = scmp.eq.s32.totalorder %s17, 1
    %p166 = por %p164, %p165
    %p167 = scmp.ne.s32.totalorder %s156, %s157
    %p168 = scmp.eq.s32.totalorder %s17, 0
    %p169 = por %p167, %p168
    %p170 = scmp.ne.s32.totalorder %s156, %s157
    %p171 = scmp.eq.s32.totalorder %s18, 1
    %p172 = por %p170, %p171
    %p174 = scmp.ne.s32.totalorder %s157, %s173
    %p175 = scmp.eq.s32.totalorder %s18, 0
    %p176 = por %p174, %p175
    %p177 = scmp.le.s32.totalorder 1, %s12
    %p178 = scmp.lt.s32.totalorder %s12, 3
    %p179 = pnand %p177, %p178
    %p180 = pneg %p179
    // Predicated region
    $region9: #{conv_module_forward.1} parent=5 // pred_check
      _
    $region10: #{conv_module_forward.1} parent=5 // pred_check_branch
      %182 = sbr.rel (%p179) target = $region12
    $region11: #{conv_module_forward.1} parent=5 // pred_region
      %s183 = ssub.s32 %s12, 1
      // Predicated region
      $region13: #{conv_module_forward.1} parent=11 // pred_check
        %p184 = pneg %p59
      $region14: #{conv_module_forward.1} parent=11 // pred_check_branch
        %186 = sbr.rel (%p184) target = $region16
      $region15: #{conv_module_forward.1} parent=11 // pred_region
        _
      $region16: #{conv_module_forward.1} parent=11 // pred_fallthru
        _
      // Predicated region
      $region17: #{conv_module_forward.1} parent=11 // pred_check
        %p187 = pneg %p80
      $region18: #{conv_module_forward.1} parent=11 // pred_check_branch
        %189 = sbr.rel (%p187) target = $region20
      $region19: #{conv_module_forward.1} parent=11 // pred_region
        _
      $region20: #{conv_module_forward.1} parent=11 // pred_fallthru
        _
      // Predicated region
      $region21: #{conv_module_forward.1} parent=11 // pred_check
        %p190 = pneg %p101
      $region22: #{conv_module_forward.1} parent=11 // pred_check_branch
        %192 = sbr.rel (%p190) target = $region24
      $region23: #{conv_module_forward.1} parent=11 // pred_region
        _
      $region24: #{conv_module_forward.1} parent=11 // pred_fallthru
        _
      // Predicated region
      $region25: #{conv_module_forward.1} parent=11 // pred_check
        %p193 = pneg %p122
      $region26: #{conv_module_forward.1} parent=11 // pred_check_branch
        %195 = sbr.rel (%p193) target = $region28
      $region27: #{conv_module_forward.1} parent=11 // pred_region
        _
      $region28: #{conv_module_forward.1} parent=11 // pred_fallthru
        _
      // Predicated region
      $region29: #{conv_module_forward.1} parent=11 // pred_check
        %p196 = pneg %p143
      $region30: #{conv_module_forward.1} parent=11 // pred_check_branch
        %198 = sbr.rel (%p196) target = $region32
      $region31: #{conv_module_forward.1} parent=11 // pred_region
        _
      $region32: #{conv_module_forward.1} parent=11 // pred_fallthru
        _
    $region12: #{conv_module_forward.1} parent=5 // pred_fallthru
      _
    %p199 = scmp.lt.s32.totalorder %s12, 2
    // Predicated region
    $region33: #{conv_module_forward.1} parent=5 // pred_check
      %p200 = pneg %p199
    $region34: #{conv_module_forward.1} parent=5 // pred_check_branch
      %202 = sbr.rel (%p200) target = $region36
    $region35: #{conv_module_forward.1} parent=5 // pred_region
      // Predicated region
      $region37: #{conv_module_forward.1} parent=35 // pred_check
        %p203 = pneg %p32
      $region38: #{conv_module_forward.1} parent=35 // pred_check_branch
        %205 = sbr.rel (%p203) target = $region40
      $region39: #{conv_module_forward.1} parent=35 // pred_region
        %p206 = scmp.lt.s32.totalorder %s12, 1
        %s207 = scalar_select %p206, %s12, 1
        %s208 = smul.addr %s207, 2
        %s209 = smul.addr %s208, 4
        %s210 = scalar_lea.vmem %s0, %s209
      $region40: #{conv_module_forward.1} parent=35 // pred_fallthru
        _
    $region36: #{conv_module_forward.1} parent=5 // pred_fallthru
      _
    %p211 = scmp.le.s32.totalorder 1, %s12
    %p212 = scmp.lt.s32.totalorder %s12, 3
    %p213 = pnand %p211, %p212
    %p214 = pneg %p213
    // Predicated region
    $region41: #{conv_module_forward.1} parent=5 // pred_check
      _
    $region42: #{conv_module_forward.1} parent=5 // pred_check_branch
      %216 = sbr.rel (%p213) target = $region44
    $region43: #{conv_module_forward.1} parent=5 // pred_region
      %s217 = ssub.s32 %s12, 1
      %p218 = scmp.lt.s32.totalorder %s17, 1
      %s219 = scalar_select %p218, %s17, 1
      %s220 = smul.addr %s219, 2
      %s221 = smul.addr %s220, 4
      %s222 = scalar_lea.vmem %s0, %s221
      %p223 = pneg %p38
      %p224 = pneg %p35
      %p225 = pneg %p59
      %p226 = pneg %p56
      %p227 = pneg %p80
      %p228 = pneg %p77
      %p229 = pneg %p101
      %p230 = pneg %p98
      %p231 = pneg %p122
      %p232 = pneg %p119
      %p233 = pneg %p143
      %p234 = pneg %p140
      %p235 = pneg %p169
      %p236 = pneg %p166
      %p237 = scmp.lt.s32.totalorder %s17, 1
      %s238 = scalar_select %p237, %s17, 1
      %s239 = smul.addr %s238, 2
      %s240 = smul.addr %s239, 8
      %s241 = scalar_lea.vmem %s6, %s240
      %p242 = scmp.lt.s32.totalorder %s17, 1
      %s243 = scalar_select %p242, %s17, 1
      %s244 = smul.addr %s243, 2
      %s245 = smul.addr %s244, 4
      %s246 = scalar_lea.vmem %s0, %s245
      %p247 = scmp.lt.s32.totalorder %s17, 1
      %s248 = scalar_select %p247, %s17, 1
      %s249 = smul.addr %s248, 2
      %s250 = smul.addr %s249, 8
      %s251 = scalar_lea.vmem %s6, %s250
      %252 = vst [vmem:[#allocation2] sm:$0xff] 0.0
      %253 = vst [vmem:[#allocation2 + $0x8] sm:$0xff] 0.0
      %254 = vst [vmem:[#allocation2 + $0x10] sm:$0xff] 0.0
      %255 = vst [vmem:[#allocation2 + $0x18] sm:$0xff] 0.0
      %256 = vst [vmem:[#allocation3] sm:$0xff] 0.0
      %257 = vst [vmem:[#allocation3 + $0x8] sm:$0xff] 0.0
      %258 = vst [vmem:[#allocation3 + $0x10] sm:$0xff] 0.0
      %259 = vst [vmem:[#allocation3 + $0x18] sm:$0xff] 0.0
      %v260 = vld [vmem:[%s246] sm:$0xff]
      %v262 = vcombine.high %v260, %v260
      %264 = vst [vmem:[#allocation2 + $0x8] sm:$0xf] %v260
      %265 = vst [vmem:[#allocation2 + $0x10] sm:$0xf] %v262
      %v266 = vld [vmem:[#allocation2] sm:$0xff]
      %v267 = vld [vmem:[#allocation2 + $0x8] sm:$0xff]
      %v268 = vld [vmem:[#allocation2 + $0x10] sm:$0xff]
      %v269 = vld [vmem:[%s1] ss:$8 sm:$0x3]
      %v271 = vlaneseq
      %v272 = vshrl.u32 %v271, 7
      %v273 = vsub.s32 0, %v272
      %v274 = vrot.slane %v269, %v273
      %v275 = vlaneseq
      %v276 = vshrl.u32 %v275, 7
      %v277 = vsub.s32 1, %v276
      %v278 = vrot.slane %v269, %v277
      %279 = vrot.lane.b32.xlu0 %v274, 111
      %v280 = vpop.permute.xlu0 %279
      %281 = vrot.lane.b32.xlu0 %v278, 111
      %v282 = vpop.permute.xlu0 %281
      %vm283 = vcmask 908288
      %v284 = vsel %vm283, %v280, %v282
      %v288 = vmul.f32 %v266, %v280
      %v289 = vmul.f32 %v267, %v284
      %v290 = vmul.f32 %v268, %v282
      %s291 = scalar_lea.vmem %s1, 1
      %v292 = vld [vmem:[%s291] ss:$8 sm:$0x3]
      %v294 = vlaneseq
      %v295 = vshrl.u32 %v294, 7
      %v296 = vsub.s32 0, %v295
      %v297 = vrot.slane %v292, %v296
      %v298 = vlaneseq
      %v299 = vshrl.u32 %v298, 7
      %v300 = vsub.s32 1, %v299
      %v301 = vrot.slane %v292, %v300
      %302 = vrot.lane.b32.xlu0 %v297, 112
      %v303 = vpop.permute.xlu0 %302
      %304 = vrot.lane.b32.xlu0 %v301, 112
      %v305 = vpop.permute.xlu0 %304
      %vm306 = vcmask 916480
      %v307 = vsel %vm306, %v303, %v305
      %v311 = vmul.f32 %v266, %v303
      %v312 = vmul.f32 %v267, %v307
      %v313 = vmul.f32 %v268, %v305
      %s314 = scalar_lea.vmem %s1, 2
      %v315 = vld [vmem:[%s314] ss:$8 sm:$0x3]
      %v317 = vlaneseq
      %v318 = vshrl.u32 %v317, 7
      %v319 = vsub.s32 0, %v318
      %v320 = vrot.slane %v315, %v319
      %v321 = vlaneseq
      %v322 = vshrl.u32 %v321, 7
      %v323 = vsub.s32 1, %v322
      %v324 = vrot.slane %v315, %v323
      %325 = vrot.lane.b32.xlu0 %v320, 113
      %v326 = vpop.permute.xlu0 %325
      %327 = vrot.lane.b32.xlu0 %v324, 113
      %v328 = vpop.permute.xlu0 %327
      %vm329 = vcmask 924672
      %v330 = vsel %vm329, %v326, %v328
      %v334 = vmul.f32 %v266, %v326
      %v335 = vmul.f32 %v267, %v330
      %v336 = vmul.f32 %v268, %v328
      %s337 = scalar_lea.vmem %s1, 3
      %v338 = vld [vmem:[%s337] ss:$8 sm:$0x3]
      %v340 = vlaneseq
      %v341 = vshrl.u32 %v340, 7
      %v342 = vsub.s32 0, %v341
      %v343 = vrot.slane %v338, %v342
      %v344 = vlaneseq
      %v345 = vshrl.u32 %v344, 7
      %v346 = vsub.s32 1, %v345
      %v347 = vrot.slane %v338, %v346
      %348 = vrot.lane.b32.xlu0 %v343, 127
      %v349 = vpop.permute.xlu0 %348
      %350 = vrot.lane.b32.xlu0 %v347, 127
      %v351 = vpop.permute.xlu0 %350
      %vm352 = vcmask 1039360
      %v353 = vsel %vm352, %v349, %v351
      %v357 = vmul.f32 %v266, %v349
      %v358 = vmul.f32 %v267, %v353
      %v359 = vmul.f32 %v268, %v351
      %s360 = scalar_lea.vmem %s1, 4
      %v361 = vld [vmem:[%s360] ss:$8 sm:$0x3]
      %v363 = vlaneseq
      %v364 = vshrl.u32 %v363, 7
      %v365 = vsub.s32 0, %v364
      %v366 = vrot.slane %v361, %v365
      %v367 = vlaneseq
      %v368 = vshrl.u32 %v367, 7
      %v369 = vsub.s32 1, %v368
      %v370 = vrot.slane %v361, %v369
      %v373 = vmul.f32 %v267, %v366
      %v374 = vmul.f32 %v268, %v370
      %v375 = vld [vmem:[#allocation2 + $0x8] sm:$0xff]
      %v376 = vld [vmem:[#allocation2 + $0x10] sm:$0xff]
      %v377 = vld [vmem:[#allocation2 + $0x18] sm:$0xff]
      %s378 = scalar_lea.vmem %s1, 5
      %v379 = vld [vmem:[%s378] ss:$8 sm:$0x3]
      %v381 = vlaneseq
      %v382 = vshrl.u32 %v381, 7
      %v383 = vsub.s32 0, %v382
      %v384 = vrot.slane %v379, %v383
      %v385 = vlaneseq
      %v386 = vshrl.u32 %v385, 7
      %v387 = vsub.s32 1, %v386
      %v388 = vrot.slane %v379, %v387
      %389 = vrot.lane.b32.xlu0 %v384, 1
      %v390 = vpop.permute.xlu0 %389
      %391 = vrot.lane.b32.xlu0 %v388, 1
      %v392 = vpop.permute.xlu0 %391
      %vm393 = vcmask 7168
      %v394 = vsel %vm393, %v390, %v392
      %v398 = vmul.f32 %v375, %v390
      %v399 = vmul.f32 %v376, %v394
      %v400 = vmul.f32 %v377, %v392
      %s401 = scalar_lea.vmem %s1, 6
      %v402 = vld [vmem:[%s401] ss:$8 sm:$0x3]
      %v404 = vlaneseq
      %v405 = vshrl.u32 %v404, 7
      %v406 = vsub.s32 0, %v405
      %v407 = vrot.slane %v402, %v406
      %v408 = vlaneseq
      %v409 = vshrl.u32 %v408, 7
      %v410 = vsub.s32 1, %v409
      %v411 = vrot.slane %v402, %v410
      %412 = vrot.lane.b32.xlu0 %v407, 15
      %v413 = vpop.permute.xlu0 %412
      %414 = vrot.lane.b32.xlu0 %v411, 15
      %v415 = vpop.permute.xlu0 %414
      %vm416 = vcmask 121856
      %v417 = vsel %vm416, %v413, %v415
      %v421 = vmul.f32 %v375, %v413
      %v422 = vmul.f32 %v376, %v417
      %v423 = vmul.f32 %v377, %v415
      %s424 = scalar_lea.vmem %s1, 7
      %v425 = vld [vmem:[%s424] ss:$8 sm:$0x3]
      %v427 = vlaneseq
      %v428 = vshrl.u32 %v427, 7
      %v429 = vsub.s32 0, %v428
      %v430 = vrot.slane %v425, %v429
      %v431 = vlaneseq
      %v432 = vshrl.u32 %v431, 7
      %v433 = vsub.s32 1, %v432
      %v434 = vrot.slane %v425, %v433
      %435 = vrot.lane.b32.xlu0 %v430, 16
      %v436 = vpop.permute.xlu0 %435
      %437 = vrot.lane.b32.xlu0 %v434, 16
      %v438 = vpop.permute.xlu0 %437
      %vm439 = vcmask 130048
      %v440 = vsel %vm439, %v436, %v438
      %v444 = vmul.f32 %v375, %v436
      %v445 = vmul.f32 %v376, %v440
      %v446 = vmul.f32 %v377, %v438
      %s447 = scalar_lea.vmem %s1, 16
      %v448 = vld [vmem:[%s447] ss:$8 sm:$0x3]
      %v450 = vlaneseq
      %v451 = vshrl.u32 %v450, 7
      %v452 = vsub.s32 0, %v451
      %v453 = vrot.slane %v448, %v452
      %v454 = vlaneseq
      %v455 = vshrl.u32 %v454, 7
      %v456 = vsub.s32 1, %v455
      %v457 = vrot.slane %v448, %v456
      %458 = vrot.lane.b32.xlu0 %v453, 17
      %v459 = vpop.permute.xlu0 %458
      %460 = vrot.lane.b32.xlu0 %v457, 17
      %v461 = vpop.permute.xlu0 %460
      %vm462 = vcmask 138240
      %v463 = vsel %vm462, %v459, %v461
      %v467 = vmul.f32 %v375, %v459
      %v468 = vmul.f32 %v376, %v463
      %v469 = vmul.f32 %v377, %v461
      %473 = vrot.lane.b32.xlu0 %v311, 127
      %v474 = vpop.permute.xlu0 %473
      %475 = vrot.lane.b32.xlu0 %v312, 127
      %v476 = vpop.permute.xlu0 %475
      %477 = vrot.lane.b32.xlu0 %v313, 127
      %v478 = vpop.permute.xlu0 %477
      %v479 = vsel %vm352, %v474, %v476
      %v480 = vsel %vm352, %v476, %v478
      %484 = vrot.lane.b32.xlu0 %v334, 126
      %v485 = vpop.permute.xlu0 %484
      %486 = vrot.lane.b32.xlu0 %v335, 126
      %v487 = vpop.permute.xlu0 %486
      %488 = vrot.lane.b32.xlu0 %v336, 126
      %v489 = vpop.permute.xlu0 %488
      %vm490 = vcmask 1031168
      %v491 = vsel %vm490, %v485, %v487
      %v492 = vsel %vm490, %v487, %v489
      %496 = vrot.lane.b32.xlu0 %v357, 112
      %v497 = vpop.permute.xlu0 %496
      %498 = vrot.lane.b32.xlu0 %v358, 112
      %v499 = vpop.permute.xlu0 %498
      %500 = vrot.lane.b32.xlu0 %v359, 112
      %v501 = vpop.permute.xlu0 %500
      %v502 = vsel %vm306, %v497, %v499
      %v503 = vsel %vm306, %v499, %v501
      %506 = vrot.lane.b32.xlu0 %v373, 111
      %v507 = vpop.permute.xlu0 %506
      %508 = vrot.lane.b32.xlu0 %v374, 111
      %v509 = vpop.permute.xlu0 %508
      %v510 = vsel %vm283, %v507, %v509
      %514 = vrot.lane.b32.xlu0 %v398, 110
      %v515 = vpop.permute.xlu0 %514
      %516 = vrot.lane.b32.xlu0 %v399, 110
      %v517 = vpop.permute.xlu0 %516
      %518 = vrot.lane.b32.xlu0 %v400, 110
      %v519 = vpop.permute.xlu0 %518
      %vm520 = vcmask 900096
      %v521 = vsel %vm520, %v515, %v517
      %v522 = vsel %vm520, %v517, %v519
      %526 = vrot.lane.b32.xlu0 %v421, 96
      %v527 = vpop.permute.xlu0 %526
      %528 = vrot.lane.b32.xlu0 %v422, 96
      %v529 = vpop.permute.xlu0 %528
      %530 = vrot.lane.b32.xlu0 %v423, 96
      %v531 = vpop.permute.xlu0 %530
      %vm532 = vcmask 785408
      %v533 = vsel %vm532, %v527, %v529
      %v534 = vsel %vm532, %v529, %v531
      %538 = vrot.lane.b32.xlu0 %v444, 95
      %v539 = vpop.permute.xlu0 %538
      %540 = vrot.lane.b32.xlu0 %v445, 95
      %v541 = vpop.permute.xlu0 %540
      %542 = vrot.lane.b32.xlu0 %v446, 95
      %v543 = vpop.permute.xlu0 %542
      %vm544 = vcmask 777216
      %v545 = vsel %vm544, %v539, %v541
      %v546 = vsel %vm544, %v541, %v543
      %550 = vrot.lane.b32.xlu0 %v467, 94
      %v551 = vpop.permute.xlu0 %550
      %552 = vrot.lane.b32.xlu0 %v468, 94
      %v553 = vpop.permute.xlu0 %552
      %554 = vrot.lane.b32.xlu0 %v469, 94
      %v555 = vpop.permute.xlu0 %554
      %vm556 = vcmask 769024
      %v557 = vsel %vm556, %v551, %v553
      %v558 = vsel %vm556, %v553, %v555
      %v559 = vld [vmem:[%s2] sm:$0xff]
      %v560 = vld [vmem:[%s3] sm:$0xff]
      %562 = vset.pattern.permute.xlu0 0
      %563 = vperm.xlu0 %562, %v560
      %v564 = vpop.permute.xlu0 %563
      %569 = vrot.lane.b32.xlu0 %v288, 17
      %v570 = vpop.permute.xlu0 %569
      %571 = vrot.lane.b32.xlu0 %v289, 17
      %v572 = vpop.permute.xlu0 %571
      %573 = vrot.lane.b32.xlu0 %v290, 17
      %v574 = vpop.permute.xlu0 %573
      %575 = vrot.lane.b32.xlu0 %v479, 17
      %v576 = vpop.permute.xlu0 %575
      %577 = vrot.lane.b32.xlu0 %v480, 17
      %v578 = vpop.permute.xlu0 %577
      %579 = vrot.lane.b32.xlu0 %v478, 17
      %v580 = vpop.permute.xlu0 %579
      %581 = vrot.lane.b32.xlu0 %v491, 17
      %v582 = vpop.permute.xlu0 %581
      %583 = vrot.lane.b32.xlu0 %v492, 17
      %v584 = vpop.permute.xlu0 %583
      %585 = vrot.lane.b32.xlu0 %v489, 17
      %v586 = vpop.permute.xlu0 %585
      %587 = vrot.lane.b32.xlu0 %v502, 17
      %v588 = vpop.permute.xlu0 %587
      %589 = vrot.lane.b32.xlu0 %v503, 17
      %v590 = vpop.permute.xlu0 %589
      %591 = vrot.lane.b32.xlu0 %v501, 17
      %v592 = vpop.permute.xlu0 %591
      %593 = vrot.lane.b32.xlu0 %v507, 17
      %v594 = vpop.permute.xlu0 %593
      %595 = vrot.lane.b32.xlu0 %v510, 17
      %v596 = vpop.permute.xlu0 %595
      %597 = vrot.lane.b32.xlu0 %v509, 17
      %v598 = vpop.permute.xlu0 %597
      %599 = vrot.lane.b32.xlu0 %v515, 17
      %v600 = vpop.permute.xlu0 %599
      %601 = vrot.lane.b32.xlu0 %v521, 17
      %v602 = vpop.permute.xlu0 %601
      %603 = vrot.lane.b32.xlu0 %v522, 17
      %v604 = vpop.permute.xlu0 %603
      %605 = vrot.lane.b32.xlu0 %v527, 17
      %v606 = vpop.permute.xlu0 %605
      %607 = vrot.lane.b32.xlu0 %v533, 17
      %v608 = vpop.permute.xlu0 %607
      %609 = vrot.lane.b32.xlu0 %v534, 17
      %v610 = vpop.permute.xlu0 %609
      %611 = vrot.lane.b32.xlu0 %v539, 17
      %v612 = vpop.permute.xlu0 %611
      %613 = vrot.lane.b32.xlu0 %v545, 17
      %v614 = vpop.permute.xlu0 %613
      %615 = vrot.lane.b32.xlu0 %v546, 17
      %v616 = vpop.permute.xlu0 %615
      %617 = vrot.lane.b32.xlu0 %v551, 17
      %v618 = vpop.permute.xlu0 %617
      %619 = vrot.lane.b32.xlu0 %v557, 17
      %v620 = vpop.permute.xlu0 %619
      %621 = vrot.lane.b32.xlu0 %v558, 17
      %v622 = vpop.permute.xlu0 %621
      %v623 = vsel %vm462, %v570, %v572
      %v624 = vsel %vm462, %v572, %v574
      %v625 = vsel %vm462, %v576, %v578
      %v626 = vsel %vm462, %v578, %v580
      %v627 = vsel %vm462, %v582, %v584
      %v628 = vsel %vm462, %v584, %v586
      %v629 = vsel %vm462, %v588, %v590
      %v630 = vsel %vm462, %v590, %v592
      %v631 = vsel %vm462, %v594, %v596
      %v632 = vsel %vm462, %v596, %v598
      %v633 = vsel %vm462, %v600, %v602
      %v634 = vsel %vm462, %v602, %v604
      %v635 = vsel %vm462, %v606, %v608
      %v636 = vsel %vm462, %v608, %v610
      %v637 = vsel %vm462, %v612, %v614
      %v638 = vsel %vm462, %v614, %v616
      %v639 = vsel %vm462, %v618, %v620
      %v640 = vsel %vm462, %v620, %v622
      %vm659 = vcmask 588800
      %v661 = vsel %vm659, %v559, 0
      %663 = vmatprep.subr.mxu0 %v624
      %664 = vmatpush1.msra.mxu0 %v623
      %665 = vmatprep.subr.mxu0 %v626
      %666 = vmatpush1.msra.mxu0 %v625
      %667 = vmatprep.subr.mxu0 %v628
      %668 = vmatpush1.msra.mxu0 %v627
      %669 = vmatprep.subr.mxu0 %v630
      %670 = vmatpush1.msra.mxu0 %v629
      %671 = vmatprep.subr.mxu0 %v632
      %672 = vmatpush1.msra.mxu0 %v631
      %673 = vmatprep.subr.mxu0 %v634
      %674 = vmatpush1.msra.mxu0 %v633
      %675 = vmatprep.subr.mxu0 %v636
      %676 = vmatpush1.msra.mxu0 %v635
      %677 = vmatprep.subr.mxu0 %v638
      %678 = vmatpush1.msra.mxu0 %v637
      %679 = vmatprep.subr.mxu0 %v640
      %680 = vmatpush1.msra.mxu0 %v639
      %681 = vmatprep.subr.mxu0 0.0
      %682 = vmatpush1.msra.mxu0 0.0
      %683 = vmatprep.subr.mxu0 0.0
      %684 = vmatpush1.msra.mxu0 0.0
      %685 = vmatprep.subr.mxu0 0.0
      %686 = vmatpush1.msra.mxu0 0.0
      %687 = vmatprep.subr.mxu0 0.0
      %688 = vmatpush1.msra.mxu0 0.0
      %689 = vmatprep.subr.mxu0 0.0
      %690 = vmatpush1.msra.mxu0 0.0
      %691 = vmatprep.subr.mxu0 0.0
      %692 = vmatpush1.msra.mxu0 0.0
      %693 = vmatprep.subr.mxu0 0.0
      %694 = vmatpush1.msra.mxu0 0.0
      %695 = vmatprep.subr.mxu0 0.0
      %696 = vmatpush1.msra.mxu0 0.0
      %697 = vmatprep.subr.mxu0 0.0
      %698 = vmatpush1.msra.mxu0 0.0
      %699 = vmatprep.subr.mxu0 0.0
      %700 = vmatpush1.msra.mxu0 0.0
      %701 = vmatprep.subr.mxu0 0.0
      %702 = vmatpush1.msra.mxu0 0.0
      %703 = vmatprep.subr.mxu0 0.0
      %704 = vmatpush1.msra.mxu0 0.0
      %705 = vmatprep.subr.mxu0 0.0
      %706 = vmatpush1.msra.mxu0 0.0
      %707 = vmatprep.subr.mxu0 0.0
      %708 = vmatpush1.msra.mxu0 0.0
      %709 = vmatprep.subr.mxu0 0.0
      %710 = vmatpush1.msra.mxu0 0.0
      %711 = vmatprep.subr.mxu0 0.0
      %712 = vmatpush1.msra.mxu0 0.0
      %713 = vmatprep.subr.mxu0 0.0
      %714 = vmatpush1.msra.mxu0 0.0
      %715 = vmatprep.subr.mxu0 0.0
      %716 = vmatpush1.msra.mxu0 0.0
      %717 = vmatprep.subr.mxu0 0.0
      %718 = vmatpush1.msra.mxu0 0.0
      %719 = vmatprep.subr.mxu0 0.0
      %720 = vmatpush1.msra.mxu0 0.0
      %721 = vmatprep.subr.mxu0 0.0
      %722 = vmatpush1.msra.mxu0 0.0
      %723 = vmatprep.subr.mxu0 0.0
      %724 = vmatpush1.msra.mxu0 0.0
      %725 = vmatprep.subr.mxu0 0.0
      %726 = vmatpush1.msra.mxu0 0.0
      %727 = vmatprep.mubr.f32.mxu0 0.0
      %728 = vmatmul.mubr.f32.gmra.mrb[0].mxu0 %v661
      %v729 = vpop.f32.mrb[0].mxu0
      %v730 = vadd.f32 %v564, %v729
      %v731 = vpop.f32.mrb[0].mxu0
      %v732 = vadd.f32 %v564, %v731
      %733 = vdwg.mxu0
      %v734 = vmax.f32 %v730, 0.0
      %v735 = vmax.f32 %v732, 0.0
      %736 = vst [vmem:[#allocation3 + $0x8] sm:$0xff] %v734
      %737 = vst [vmem:[#allocation3 + $0x10] sm:$0xff] %v735
      %v738 = vld [vmem:[#allocation3] sm:$0xff]
      %v739 = vld [vmem:[#allocation3 + $0x8] sm:$0xff]
      %v740 = vld [vmem:[#allocation3 + $0x10] sm:$0xff]
      %v741 = vld [vmem:[%s1] ss:$8 sm:$0x3]
      %v743 = vlaneseq
      %v744 = vshrl.u32 %v743, 7
      %v745 = vsub.s32 0, %v744
      %v746 = vrot.slane %v741, %v745
      %v747 = vlaneseq
      %v748 = vshrl.u32 %v747, 7
      %v749 = vsub.s32 1, %v748
      %v750 = vrot.slane %v741, %v749
      %751 = vrot.lane.b32.xlu0 %v746, 111
      %v752 = vpop.permute.xlu0 %751
      %753 = vrot.lane.b32.xlu0 %v750, 111
      %v754 = vpop.permute.xlu0 %753
      %v755 = vsel %vm283, %v752, %v754
      %v759 = vmul.f32 %v738, %v752
      %v760 = vmul.f32 %v739, %v755
      %v761 = vmul.f32 %v740, %v754
      %v762 = vld [vmem:[%s291] ss:$8 sm:$0x3]
      %v764 = vlaneseq
      %v765 = vshrl.u32 %v764, 7
      %v766 = vsub.s32 0, %v765
      %v767 = vrot.slane %v762, %v766
      %v768 = vlaneseq
      %v769 = vshrl.u32 %v768, 7
      %v770 = vsub.s32 1, %v769
      %v771 = vrot.slane %v762, %v770
      %772 = vrot.lane.b32.xlu0 %v767, 112
      %v773 = vpop.permute.xlu0 %772
      %774 = vrot.lane.b32.xlu0 %v771, 112
      %v775 = vpop.permute.xlu0 %774
      %v776 = vsel %vm306, %v773, %v775
      %v780 = vmul.f32 %v738, %v773
      %v781 = vmul.f32 %v739, %v776
      %v782 = vmul.f32 %v740, %v775
      %v783 = vld [vmem:[%s314] ss:$8 sm:$0x3]
      %v785 = vlaneseq
      %v786 = vshrl.u32 %v785, 7
      %v787 = vsub.s32 0, %v786
      %v788 = vrot.slane %v783, %v787
      %v789 = vlaneseq
      %v790 = vshrl.u32 %v789, 7
      %v791 = vsub.s32 1, %v790
      %v792 = vrot.slane %v783, %v791
      %793 = vrot.lane.b32.xlu0 %v788, 113
      %v794 = vpop.permute.xlu0 %793
      %795 = vrot.lane.b32.xlu0 %v792, 113
      %v796 = vpop.permute.xlu0 %795
      %v797 = vsel %vm329, %v794, %v796
      %v801 = vmul.f32 %v738, %v794
      %v802 = vmul.f32 %v739, %v797
      %v803 = vmul.f32 %v740, %v796
      %v804 = vld [vmem:[%s337] ss:$8 sm:$0x3]
      %v806 = vlaneseq
      %v807 = vshrl.u32 %v806, 7
      %v808 = vsub.s32 0, %v807
      %v809 = vrot.slane %v804, %v808
      %v810 = vlaneseq
      %v811 = vshrl.u32 %v810, 7
      %v812 = vsub.s32 1, %v811
      %v813 = vrot.slane %v804, %v812
      %814 = vrot.lane.b32.xlu0 %v809, 127
      %v815 = vpop.permute.xlu0 %814
      %816 = vrot.lane.b32.xlu0 %v813, 127
      %v817 = vpop.permute.xlu0 %816
      %v818 = vsel %vm352, %v815, %v817
      %v822 = vmul.f32 %v738, %v815
      %v823 = vmul.f32 %v739, %v818
      %v824 = vmul.f32 %v740, %v817
      %v825 = vld [vmem:[%s360] ss:$8 sm:$0x3]
      %v827 = vlaneseq
      %v828 = vshrl.u32 %v827, 7
      %v829 = vsub.s32 0, %v828
      %v830 = vrot.slane %v825, %v829
      %v831 = vlaneseq
      %v832 = vshrl.u32 %v831, 7
      %v833 = vsub.s32 1, %v832
      %v834 = vrot.slane %v825, %v833
      %v837 = vmul.f32 %v739, %v830
      %v838 = vmul.f32 %v740, %v834
      %v839 = vld [vmem:[#allocation3 + $0x8] sm:$0xff]
      %v840 = vld [vmem:[#allocation3 + $0x10] sm:$0xff]
      %v841 = vld [vmem:[#allocation3 + $0x18] sm:$0xff]
      %v842 = vld [vmem:[%s378] ss:$8 sm:$0x3]
      %v844 = vlaneseq
      %v845 = vshrl.u32 %v844, 7
      %v846 = vsub.s32 0, %v845
      %v847 = vrot.slane %v842, %v846
      %v848 = vlaneseq
      %v849 = vshrl.u32 %v848, 7
      %v850 = vsub.s32 1, %v849
      %v851 = vrot.slane %v842, %v850
      %852 = vrot.lane.b32.xlu0 %v847, 1
      %v853 = vpop.permute.xlu0 %852
      %854 = vrot.lane.b32.xlu0 %v851, 1
      %v855 = vpop.permute.xlu0 %854
      %v856 = vsel %vm393, %v853, %v855
      %v860 = vmul.f32 %v839, %v853
      %v861 = vmul.f32 %v840, %v856
      %v862 = vmul.f32 %v841, %v855
      %v863 = vld [vmem:[%s401] ss:$8 sm:$0x3]
      %v865 = vlaneseq
      %v866 = vshrl.u32 %v865, 7
      %v867 = vsub.s32 0, %v866
      %v868 = vrot.slane %v863, %v867
      %v869 = vlaneseq
      %v870 = vshrl.u32 %v869, 7
      %v871 = vsub.s32 1, %v870
      %v872 = vrot.slane %v863, %v871
      %873 = vrot.lane.b32.xlu0 %v868, 15
      %v874 = vpop.permute.xlu0 %873
      %875 = vrot.lane.b32.xlu0 %v872, 15
      %v876 = vpop.permute.xlu0 %875
      %v877 = vsel %vm416, %v874, %v876
      %v881 = vmul.f32 %v839, %v874
      %v882 = vmul.f32 %v840, %v877
      %v883 = vmul.f32 %v841, %v876
      %v884 = vld [vmem:[%s424] ss:$8 sm:$0x3]
      %v886 = vlaneseq
      %v887 = vshrl.u32 %v886, 7
      %v888 = vsub.s32 0, %v887
      %v889 = vrot.slane %v884, %v888
      %v890 = vlaneseq
      %v891 = vshrl.u32 %v890, 7
      %v892 = vsub.s32 1, %v891
      %v893 = vrot.slane %v884, %v892
      %894 = vrot.lane.b32.xlu0 %v889, 16
      %v895 = vpop.permute.xlu0 %894
      %896 = vrot.lane.b32.xlu0 %v893, 16
      %v897 = vpop.permute.xlu0 %896
      %v898 = vsel %vm439, %v895, %v897
      %v902 = vmul.f32 %v839, %v895
      %v903 = vmul.f32 %v840, %v898
      %v904 = vmul.f32 %v841, %v897
      %v905 = vld [vmem:[%s447] ss:$8 sm:$0x3]
      %v907 = vlaneseq
      %v908 = vshrl.u32 %v907, 7
      %v909 = vsub.s32 0, %v908
      %v910 = vrot.slane %v905, %v909
      %v911 = vlaneseq
      %v912 = vshrl.u32 %v911, 7
      %v913 = vsub.s32 1, %v912
      %v914 = vrot.slane %v905, %v913
      %915 = vrot.lane.b32.xlu0 %v910, 17
      %v916 = vpop.permute.xlu0 %915
      %917 = vrot.lane.b32.xlu0 %v914, 17
      %v918 = vpop.permute.xlu0 %917
      %v919 = vsel %vm462, %v916, %v918
      %v923 = vmul.f32 %v839, %v916
      %v924 = vmul.f32 %v840, %v919
      %v925 = vmul.f32 %v841, %v918
      %929 = vrot.lane.b32.xlu0 %v780, 127
      %v930 = vpop.permute.xlu0 %929
      %931 = vrot.lane.b32.xlu0 %v781, 127
      %v932 = vpop.permute.xlu0 %931
      %933 = vrot.lane.b32.xlu0 %v782, 127
      %v934 = vpop.permute.xlu0 %933
      %v935 = vsel %vm352, %v930, %v932
      %v936 = vsel %vm352, %v932, %v934
      %940 = vrot.lane.b32.xlu0 %v801, 126
      %v941 = vpop.permute.xlu0 %940
      %942 = vrot.lane.b32.xlu0 %v802, 126
      %v943 = vpop.permute.xlu0 %942
      %944 = vrot.lane.b32.xlu0 %v803, 126
      %v945 = vpop.permute.xlu0 %944
      %v946 = vsel %vm490, %v941, %v943
      %v947 = vsel %vm490, %v943, %v945
      %951 = vrot.lane.b32.xlu0 %v822, 112
      %v952 = vpop.permute.xlu0 %951
      %953 = vrot.lane.b32.xlu0 %v823, 112
      %v954 = vpop.permute.xlu0 %953
      %955 = vrot.lane.b32.xlu0 %v824, 112
      %v956 = vpop.permute.xlu0 %955
      %v957 = vsel %vm306, %v952, %v954
      %v958 = vsel %vm306, %v954, %v956
      %961 = vrot.lane.b32.xlu0 %v837, 111
      %v962 = vpop.permute.xlu0 %961
      %963 = vrot.lane.b32.xlu0 %v838, 111
      %v964 = vpop.permute.xlu0 %963
      %v965 = vsel %vm283, %v962, %v964
      %969 = vrot.lane.b32.xlu0 %v860, 110
      %v970 = vpop.permute.xlu0 %969
      %971 = vrot.lane.b32.xlu0 %v861, 110
      %v972 = vpop.permute.xlu0 %971
      %973 = vrot.lane.b32.xlu0 %v862, 110
      %v974 = vpop.permute.xlu0 %973
      %v975 = vsel %vm520, %v970, %v972
      %v976 = vsel %vm520, %v972, %v974
      %980 = vrot.lane.b32.xlu0 %v881, 96
      %v981 = vpop.permute.xlu0 %980
      %982 = vrot.lane.b32.xlu0 %v882, 96
      %v983 = vpop.permute.xlu0 %982
      %984 = vrot.lane.b32.xlu0 %v883, 96
      %v985 = vpop.permute.xlu0 %984
      %v986 = vsel %vm532, %v981, %v983
      %v987 = vsel %vm532, %v983, %v985
      %991 = vrot.lane.b32.xlu0 %v902, 95
      %v992 = vpop.permute.xlu0 %991
      %993 = vrot.lane.b32.xlu0 %v903, 95
      %v994 = vpop.permute.xlu0 %993
      %995 = vrot.lane.b32.xlu0 %v904, 95
      %v996 = vpop.permute.xlu0 %995
      %v997 = vsel %vm544, %v992, %v994
      %v998 = vsel %vm544, %v994, %v996
      %1002 = vrot.lane.b32.xlu0 %v923, 94
      %v1003 = vpop.permute.xlu0 %1002
      %1004 = vrot.lane.b32.xlu0 %v924, 94
      %v1005 = vpop.permute.xlu0 %1004
      %1006 = vrot.lane.b32.xlu0 %v925, 94
      %v1007 = vpop.permute.xlu0 %1006
      %v1008 = vsel %vm556, %v1003, %v1005
      %v1009 = vsel %vm556, %v1005, %v1007
      %v1010 = vld [vmem:[%s4] sm:$0xff]
      %v1011 = vld [vmem:[%s5] sm:$0xff]
      %1013 = vset.pattern.permute.xlu0 0
      %1014 = vperm.xlu0 %1013, %v1011
      %v1015 = vpop.permute.xlu0 %1014
      %1020 = vrot.lane.b32.xlu0 %v759, 17
      %v1021 = vpop.permute.xlu0 %1020
      %1022 = vrot.lane.b32.xlu0 %v760, 17
      %v1023 = vpop.permute.xlu0 %1022
      %1024 = vrot.lane.b32.xlu0 %v761, 17
      %v1025 = vpop.permute.xlu0 %1024
      %1026 = vrot.lane.b32.xlu0 %v935, 17
      %v1027 = vpop.permute.xlu0 %1026
      %1028 = vrot.lane.b32.xlu0 %v936, 17
      %v1029 = vpop.permute.xlu0 %1028
      %1030 = vrot.lane.b32.xlu0 %v934, 17
      %v1031 = vpop.permute.xlu0 %1030
      %1032 = vrot.lane.b32.xlu0 %v946, 17
      %v1033 = vpop.permute.xlu0 %1032
      %1034 = vrot.lane.b32.xlu0 %v947, 17
      %v1035 = vpop.permute.xlu0 %1034
      %1036 = vrot.lane.b32.xlu0 %v945, 17
      %v1037 = vpop.permute.xlu0 %1036
      %1038 = vrot.lane.b32.xlu0 %v957, 17
      %v1039 = vpop.permute.xlu0 %1038
      %1040 = vrot.lane.b32.xlu0 %v958, 17
      %v1041 = vpop.permute.xlu0 %1040
      %1042 = vrot.lane.b32.xlu0 %v956, 17
      %v1043 = vpop.permute.xlu0 %1042
      %1044 = vrot.lane.b32.xlu0 %v962, 17
      %v1045 = vpop.permute.xlu0 %1044
      %1046 = vrot.lane.b32.xlu0 %v965, 17
      %v1047 = vpop.permute.xlu0 %1046
      %1048 = vrot.lane.b32.xlu0 %v964, 17
      %v1049 = vpop.permute.xlu0 %1048
      %1050 = vrot.lane.b32.xlu0 %v970, 17
      %v1051 = vpop.permute.xlu0 %1050
      %1052 = vrot.lane.b32.xlu0 %v975, 17
      %v1053 = vpop.permute.xlu0 %1052
      %1054 = vrot.lane.b32.xlu0 %v976, 17
      %v1055 = vpop.permute.xlu0 %1054
      %1056 = vrot.lane.b32.xlu0 %v981, 17
      %v1057 = vpop.permute.xlu0 %1056
      %1058 = vrot.lane.b32.xlu0 %v986, 17
      %v1059 = vpop.permute.xlu0 %1058
      %1060 = vrot.lane.b32.xlu0 %v987, 17
      %v1061 = vpop.permute.xlu0 %1060
      %1062 = vrot.lane.b32.xlu0 %v992, 17
      %v1063 = vpop.permute.xlu0 %1062
      %1064 = vrot.lane.b32.xlu0 %v997, 17
      %v1065 = vpop.permute.xlu0 %1064
      %1066 = vrot.lane.b32.xlu0 %v998, 17
      %v1067 = vpop.permute.xlu0 %1066
      %1068 = vrot.lane.b32.xlu0 %v1003, 17
      %v1069 = vpop.permute.xlu0 %1068
      %1070 = vrot.lane.b32.xlu0 %v1008, 17
      %v1071 = vpop.permute.xlu0 %1070
      %1072 = vrot.lane.b32.xlu0 %v1009, 17
      %v1073 = vpop.permute.xlu0 %1072
      %v1074 = vsel %vm462, %v1021, %v1023
      %v1075 = vsel %vm462, %v1023, %v1025
      %v1076 = vsel %vm462, %v1027, %v1029
      %v1077 = vsel %vm462, %v1029, %v1031
      %v1078 = vsel %vm462, %v1033, %v1035
      %v1079 = vsel %vm462, %v1035, %v1037
      %v1080 = vsel %vm462, %v1039, %v1041
      %v1081 = vsel %vm462, %v1041, %v1043
      %v1082 = vsel %vm462, %v1045, %v1047
      %v1083 = vsel %vm462, %v1047, %v1049
      %v1084 = vsel %vm462, %v1051, %v1053
      %v1085 = vsel %vm462, %v1053, %v1055
      %v1086 = vsel %vm462, %v1057, %v1059
      %v1087 = vsel %vm462, %v1059, %v1061
      %v1088 = vsel %vm462, %v1063, %v1065
      %v1089 = vsel %vm462, %v1065, %v1067
      %v1090 = vsel %vm462, %v1069, %v1071
      %v1091 = vsel %vm462, %v1071, %v1073
      %v1111 = vsel %vm659, %v1010, 0
      %1113 = vmatprep.subr.mxu0 %v1075
      %1114 = vmatpush1.msra.mxu0 %v1074
      %1115 = vmatprep.subr.mxu0 %v1077
      %1116 = vmatpush1.msra.mxu0 %v1076
      %1117 = vmatprep.subr.mxu0 %v1079
      %1118 = vmatpush1.msra.mxu0 %v1078
      %1119 = vmatprep.subr.mxu0 %v1081
      %1120 = vmatpush1.msra.mxu0 %v1080
      %1121 = vmatprep.subr.mxu0 %v1083
      %1122 = vmatpush1.msra.mxu0 %v1082
      %1123 = vmatprep.subr.mxu0 %v1085
      %1124 = vmatpush1.msra.mxu0 %v1084
      %1125 = vmatprep.subr.mxu0 %v1087
      %1126 = vmatpush1.msra.mxu0 %v1086
      %1127 = vmatprep.subr.mxu0 %v1089
      %1128 = vmatpush1.msra.mxu0 %v1088
      %1129 = vmatprep.subr.mxu0 %v1091
      %1130 = vmatpush1.msra.mxu0 %v1090
      %1131 = vmatprep.subr.mxu0 0.0
      %1132 = vmatpush1.msra.mxu0 0.0
      %1133 = vmatprep.subr.mxu0 0.0
      %1134 = vmatpush1.msra.mxu0 0.0
      %1135 = vmatprep.subr.mxu0 0.0
      %1136 = vmatpush1.msra.mxu0 0.0
      %1137 = vmatprep.subr.mxu0 0.0
      %1138 = vmatpush1.msra.mxu0 0.0
      %1139 = vmatprep.subr.mxu0 0.0
      %1140 = vmatpush1.msra.mxu0 0.0
      %1141 = vmatprep.subr.mxu0 0.0
      %1142 = vmatpush1.msra.mxu0 0.0
      %1143 = vmatprep.subr.mxu0 0.0
      %1144 = vmatpush1.msra.mxu0 0.0
      %1145 = vmatprep.subr.mxu0 0.0
      %1146 = vmatpush1.msra.mxu0 0.0
      %1147 = vmatprep.subr.mxu0 0.0
      %1148 = vmatpush1.msra.mxu0 0.0
      %1149 = vmatprep.subr.mxu0 0.0
      %1150 = vmatpush1.msra.mxu0 0.0
      %1151 = vmatprep.subr.mxu0 0.0
      %1152 = vmatpush1.msra.mxu0 0.0
      %1153 = vmatprep.subr.mxu0 0.0
      %1154 = vmatpush1.msra.mxu0 0.0
      %1155 = vmatprep.subr.mxu0 0.0
      %1156 = vmatpush1.msra.mxu0 0.0
      %1157 = vmatprep.subr.mxu0 0.0
      %1158 = vmatpush1.msra.mxu0 0.0
      %1159 = vmatprep.subr.mxu0 0.0
      %1160 = vmatpush1.msra.mxu0 0.0
      %1161 = vmatprep.subr.mxu0 0.0
      %1162 = vmatpush1.msra.mxu0 0.0
      %1163 = vmatprep.subr.mxu0 0.0
      %1164 = vmatpush1.msra.mxu0 0.0
      %1165 = vmatprep.subr.mxu0 0.0
      %1166 = vmatpush1.msra.mxu0 0.0
      %1167 = vmatprep.subr.mxu0 0.0
      %1168 = vmatpush1.msra.mxu0 0.0
      %1169 = vmatprep.subr.mxu0 0.0
      %1170 = vmatpush1.msra.mxu0 0.0
      %1171 = vmatprep.subr.mxu0 0.0
      %1172 = vmatpush1.msra.mxu0 0.0
      %1173 = vmatprep.subr.mxu0 0.0
      %1174 = vmatpush1.msra.mxu0 0.0
      %1175 = vmatprep.subr.mxu0 0.0
      %1176 = vmatpush1.msra.mxu0 0.0
      %1177 = vmatprep.mubr.f32.mxu0 0.0
      %1178 = vmatmul.mubr.f32.gmra.mrb[0].mxu0 %v1111
      %v1179 = vpop.f32.mrb[0].mxu0
      %v1180 = vadd.f32 %v1015, %v1179
      %v1181 = vpop.f32.mrb[0].mxu0
      %v1182 = vadd.f32 %v1015, %v1181
      %1183 = vdwg.mxu0
      %v1184 = vmax.f32 %v1180, 0.0
      %v1185 = vmax.f32 %v1182, 0.0
      %1186 = vst [vmem:[%s251] sm:$0xff] %v1184
      %1187 = vst [vmem:[%s251 + $0x8] sm:$0xff] %v1185
      %p1188 = scmp.lt.s32.totalorder %s17, 1
      %s1189 = scalar_select %p1188, %s17, 1
      %s1190 = smul.addr %s1189, 2
      %s1191 = smul.addr %s1190, 8
      %s1192 = scalar_lea.vmem %s6, %s1191
      // Predicated region
      $region45: #{conv_module_forward.1} parent=43 // pred_check
        %p1193 = pneg %p166
      $region46: #{conv_module_forward.1} parent=43 // pred_check_branch
        %1195 = sbr.rel (%p1193) target = $region48
      $region47: #{conv_module_forward.1} parent=43 // pred_region
        _
      $region48: #{conv_module_forward.1} parent=43 // pred_fallthru
        _
    $region44: #{conv_module_forward.1} parent=5 // pred_fallthru
      _
    %p1196 = scmp.le.s32.totalorder 2, %s12
    // Predicated region
    $region49: #{conv_module_forward.1} parent=5 // pred_check
      %p1197 = pneg %p1196
    $region50: #{conv_module_forward.1} parent=5 // pred_check_branch
      %1199 = sbr.rel (%p1197) target = $region52
    $region51: #{conv_module_forward.1} parent=5 // pred_region
      %s1200 = ssub.s32 %s12, 2
      // Predicated region
      $region53: #{conv_module_forward.1} parent=51 // pred_check
        %p1201 = pneg %p172
      $region54: #{conv_module_forward.1} parent=51 // pred_check_branch
        %1203 = sbr.rel (%p1201) target = $region56
      $region55: #{conv_module_forward.1} parent=51 // pred_region
        %p1204 = scmp.lt.s32.totalorder %s18, 1
        %s1205 = scalar_select %p1204, %s18, 1
        %s1206 = smul.addr %s1205, 2
        %s1207 = smul.addr %s1206, 8
        %s1208 = scalar_lea.vmem %s6, %s1207
      $region56: #{conv_module_forward.1} parent=51 // pred_fallthru
        _
    $region52: #{conv_module_forward.1} parent=5 // pred_fallthru
      _
  $region6: #{conv_module_forward.1} parent=0 // loop_footer
    %s16 = sadd.s32 1, %s12
  $region7: #{conv_module_forward.1} parent=0 // loop_footer_branch
    %11 = sbr.rel target = $region3
  $region8: #{conv_module_forward.1} parent=0 // loop_exit
    _

</llo_original>
